<compile_context>
chip_gen: v5e
topology: v5e:2x2
jax: 0.10.0
libtpu: 0.0.40
codegen_flags: <defaults>
</compile_context>

<pallas_src>
import jax
import jax.numpy as jnp
from jax.experimental import pallas as pl
from jax.experimental.pallas import tpu as pltpu


def _round_up(n, m):
    return (n + m - 1) // m * m


def _value_net_kernel(x_ref, w1_ref, b1_ref, w2_ref, b2_ref, w3_ref, b3_ref,
                      out_ref):
    """One batch tile of relu(W1 x^T + b1) -> relu(W2 . + b2) -> w3 . + b3.

    Transposed orientation: activations are (hid_p, batch_tile), so the final
    1-wide layer reduces over sublanes and the per-row values come out as a
    lane-dense (1, batch_tile) row (packed output, no masked stores).
    """
    cd = w1_ref.dtype
    # Cast x on the VPU (no wrapper-side pad/cast pass over the activations).
    x = x_ref[...].astype(cd)                                 # (tile, in_dim)
    # Layer 1 (MXU): contract over in_dim -> (hid_p, tile), f32 accumulate.
    h1 = jax.lax.dot_general(w1_ref[...], x,
                             dimension_numbers=(((1,), (1,)), ((), ())),
                             preferred_element_type=jnp.float32)
    h1 = jnp.maximum(h1 + b1_ref[...], 0.0)      # bias column, lane broadcast
    # Layer 2 (MXU): (hid_p, hid_p) @ (hid_p, tile) -> (hid_p, tile).
    h2 = jnp.dot(w2_ref[...], h1.astype(cd),
                 preferred_element_type=jnp.float32)
    h2 = jnp.maximum(h2 + b2_ref[...], 0.0)
    # Layer 3 (out_features == 1): VPU multiply + XLU sublane reduction
    # instead of an MXU matmul with a 1-wide output.  Result is lane-dense.
    v = jnp.sum(h2 * w3_ref[...], axis=0, keepdims=True)     # (1, tile) f32
    v = v + b3_ref[0, 0]                                      # SMEM scalar
    out_ref[...] = v.reshape(out_ref.shape).astype(out_ref.dtype)


def prepare_params(params, compute_dtype=jnp.bfloat16):
    """One-time parameter prep (hoisted out of the forward pass).

    Pads the hidden dim to a multiple of 128 lanes (zero padding -> exact),
    lays weights out for the transposed kernel orientation (PyTorch (out, in)
    layout is already what the kernel wants) and casts the MXU operands to
    `compute_dtype`.  Reuse the result across forward calls.
    """
    w1, b1 = params["w1"], params["b1"]      # (hidden, in), (hidden,)
    w2, b2 = params["w2"], params["b2"]      # (hidden, hidden), (hidden,)
    w3, b3 = params["w3"], params["b3"]      # (1, hidden), (1,)
    hidden, _ = w1.shape
    hid_p = _round_up(hidden, 128)
    pad_h = hid_p - hidden
    f32 = jnp.float32
    return {
        "w1": jnp.pad(w1.astype(f32), ((0, pad_h), (0, 0))).astype(compute_dtype),
        "w2": jnp.pad(w2.astype(f32), ((0, pad_h), (0, pad_h))).astype(compute_dtype),
        "w3": jnp.pad(w3.astype(f32).reshape(hidden, 1), ((0, pad_h), (0, 0))),
        "b1": jnp.pad(b1.astype(f32).reshape(hidden, 1), ((0, pad_h), (0, 0))),
        "b2": jnp.pad(b2.astype(f32).reshape(hidden, 1), ((0, pad_h), (0, 0))),
        "b3": b3.astype(f32).reshape(1, 1),
    }


def _choose_batch_tile(B, requested=None):
    if requested is not None:
        return max(128, _round_up(int(requested), 128))
    # ~512-row tiles (1024 for very large batches: bigger tiles push this
    # mem-bound stream toward the HBM roofline on v5e/v6e), >=2 grid steps
    # once there is enough work so dimension_semantics=("parallel",) can use
    # both v7x TensorCores, and tile = cdiv(B, steps) rounded to 128 so batch
    # padding stays small.
    target = 1024 if B >= 4096 else 512
    steps = pl.cdiv(B, target)
    if B > 256:
        steps = max(steps, 2)
    return max(128, _round_up(pl.cdiv(B, max(steps, 1)), 128))


def value_network_forward(x, prepped, *, batch_tile=None):
    """x: (B, input_size) float32.  prepped: output of prepare_params()."""
    B, in_dim = x.shape
    w1 = prepped["w1"]
    hid_p, in_dim_w = w1.shape
    assert in_dim_w == in_dim, (in_dim_w, in_dim)
    compute_dtype = w1.dtype

    batch_tile = _choose_batch_tile(B, batch_tile)
    grid_b = pl.cdiv(B, batch_tile)

    # --- VMEM budget: double-buffered pipeline buffers + f32 intermediates,
    #     plus headroom, capped at 48 MiB (< 64 MiB per-TC VMEM on v7x).
    lane = 128
    csz = jnp.dtype(compute_dtype).itemsize
    in_l = _round_up(in_dim, lane)
    buf_bytes = (
        batch_tile * in_l * 4                          # x tile (f32, lane pad)
        + 8 * batch_tile * 4                           # packed out tile
        + hid_p * in_l * csz + hid_p * hid_p * csz     # w1, w2
        + 3 * hid_p * lane * 4                         # b1, b2, w3 columns
    )
    interm_bytes = 2 * hid_p * batch_tile * 4 + 2 * batch_tile * in_l * csz
    vmem_limit = int(min(max(2 * buf_bytes + interm_bytes + (8 << 20),
                             16 << 20), 48 << 20))
    # TODO(synk): for hidden sizes where w2 stops fitting comfortably in VMEM,
    # single-buffer the grid-invariant weight blocks (pl.Buffered(1)) and add
    # a grid axis tiling layer 2 over its output rows.

    out_packed = pl.pallas_call(
        _value_net_kernel,
        out_shape=jax.ShapeDtypeStruct((grid_b, 1, batch_tile), jnp.float32),
        grid_spec=pltpu.PrefetchScalarGridSpec(
            num_scalar_prefetch=0,
            grid=(grid_b,),
            in_specs=[
                # x: streamed over the batch axis, unpadded f32 (feature block
                # == full in_dim; ragged last block handled by Pallas).
                pl.BlockSpec((batch_tile, in_dim), lambda i: (i, 0)),
                # Grid-invariant weights / bias columns (fetched once).
                pl.BlockSpec((hid_p, in_dim), lambda i: (0, 0)),
                pl.BlockSpec((hid_p, 1), lambda i: (0, 0)),
                pl.BlockSpec((hid_p, hid_p), lambda i: (0, 0)),
                pl.BlockSpec((hid_p, 1), lambda i: (0, 0)),
                pl.BlockSpec((hid_p, 1), lambda i: (0, 0)),
                # b3: scalar bias in SMEM.
                pl.BlockSpec(memory_space=pltpu.MemorySpace.SMEM),
            ],
            out_specs=pl.BlockSpec((1, 1, batch_tile), lambda i: (i, 0, 0)),
        ),
        compiler_params=pltpu.CompilerParams(
            dimension_semantics=("parallel",),
            vmem_limit_bytes=vmem_limit),
    )(x, prepped["w1"], prepped["b1"], prepped["w2"], prepped["b2"],
      prepped["w3"], prepped["b3"])

    # Un-pack: batch row r is lane (r % batch_tile) of grid step r // batch_tile.
    return out_packed.reshape(-1)[:B].reshape(B, 1)


def init_params(key, input_size, hidden_size):
    """nn.Linear-style init; weights stored in PyTorch layout (out, in)."""
    ks = jax.random.split(key, 6)

    def lin(kw, kb, fan_in, fan_out):
        bound = 1.0 / jnp.sqrt(jnp.float32(fan_in))
        w = jax.random.uniform(kw, (fan_out, fan_in), jnp.float32, -bound, bound)
        b = jax.random.uniform(kb, (fan_out,), jnp.float32, -bound, bound)
        return w, b

    w1, b1 = lin(ks[0], ks[1], input_size, hidden_size)
    w2, b2 = lin(ks[2], ks[3], hidden_size, hidden_size)
    w3, b3 = lin(ks[4], ks[5], hidden_size, 1)
    return {"w1": w1, "b1": b1, "w2": w2, "b2": b2, "w3": w3, "b3": b3}


def value_network_ref(x, p):
    """Pure-JAX f32 reference of the PyTorch forward (highest precision)."""
    hp = jax.lax.Precision.HIGHEST
    h = jnp.maximum(jnp.dot(x, p["w1"].T, precision=hp) + p["b1"], 0.0)
    h = jnp.maximum(jnp.dot(h, p["w2"].T, precision=hp) + p["b2"], 0.0)
    return jnp.dot(h, p["w3"].T, precision=hp) + p["b3"]


if __name__ == "__main__":
    key = jax.random.PRNGKey(0)
    k_param, k_x, k_x2 = jax.random.split(key, 3)

    batch, input_size, hidden_size = 8, 16, 32
    params = init_params(k_param, input_size, hidden_size)
    x = jax.random.normal(k_x, (batch, input_size), jnp.float32)
    ref = value_network_ref(x, params)

    # 1) f32 compute path (tight tolerance vs the f32 reference).
    prepped_f32 = prepare_params(params, compute_dtype=jnp.float32)
    out_f32 = jax.block_until_ready(value_network_forward(x, prepped_f32))
    assert out_f32.shape == (batch, 1), out_f32.shape
    assert jnp.allclose(out_f32, ref, atol=1e-4, rtol=1e-4), (
        f"f32 max err {jnp.max(jnp.abs(out_f32 - ref))}")

    # 2) Default bf16 MXU path (params prepped once, reused).
    prepped_bf16 = prepare_params(params)
    out_bf16 = jax.block_until_ready(value_network_forward(x, prepped_bf16))
    assert out_bf16.shape == (batch, 1), out_bf16.shape
    assert jnp.allclose(out_bf16, ref, atol=5e-2, rtol=5e-2), (
        f"bf16 max err {jnp.max(jnp.abs(out_bf16 - ref))}")

    # 3) Ragged batch exercising a multi-step pipelined grid and the partial
    #    last block (no wrapper-side padding of x).
    x2 = jax.random.normal(k_x2, (300, input_size), jnp.float32)
    ref2 = value_network_ref(x2, params)
    out2 = jax.block_until_ready(
        value_network_forward(x2, prepped_f32, batch_tile=128))
    assert out2.shape == (300, 1), out2.shape
    assert jnp.allclose(out2, ref2, atol=1e-4, rtol=1e-4), (
        f"tiled max err {jnp.max(jnp.abs(out2 - ref2))}")

    print("KERNEL_OK")
</pallas_src>

<mosaic_0001>
module attributes {stable_mosaic.version = 11 : i64} {
  func.func @_value_net_kernel(%arg0: i32, %arg1: memref<128x16xf32, #tpu.memory_space<vmem>>, %arg2: memref<128x16xf32, #tpu.memory_space<vmem>>, %arg3: memref<128x1xf32, #tpu.memory_space<vmem>>, %arg4: memref<128x128xf32, #tpu.memory_space<vmem>>, %arg5: memref<128x1xf32, #tpu.memory_space<vmem>>, %arg6: memref<128x1xf32, #tpu.memory_space<vmem>>, %arg7: memref<1x1xf32, #tpu.memory_space<smem>>, %arg8: memref<1x1x128xf32, #tpu.memory_space<vmem>>) attributes {dimension_semantics = [#tpu.dimension_semantics<parallel>], iteration_bounds = array<i64: 1>, scalar_prefetch = 0 : i64, scratch_operands = 0 : i64, tpu.core_type = #tpu.core_type<tc>, window_params = [{transform_indices = @transform_0, window_bounds = array<i64: 128, 16>}, {pipeline_mode = #tpu.pipeline_mode<synchronous>, transform_indices = @transform_1, window_bounds = array<i64: 128, 16>}, {pipeline_mode = #tpu.pipeline_mode<synchronous>, transform_indices = @transform_2, window_bounds = array<i64: 128, 1>}, {pipeline_mode = #tpu.pipeline_mode<synchronous>, transform_indices = @transform_3, window_bounds = array<i64: 128, 128>}, {pipeline_mode = #tpu.pipeline_mode<synchronous>, transform_indices = @transform_4, window_bounds = array<i64: 128, 1>}, {pipeline_mode = #tpu.pipeline_mode<synchronous>, transform_indices = @transform_5, window_bounds = array<i64: 128, 1>}, {transform_indices = @transform_6, window_bounds = array<i64: 1, 1>}, {transform_indices = @transform_7, window_bounds = array<i64: 1, 1, 128>}]} {
    %c0 = arith.constant 0 : index
    %c0_0 = arith.constant 0 : index
    %0 = vector.load %arg1[%c0, %c0_0] : memref<128x16xf32, #tpu.memory_space<vmem>>, vector<128x16xf32>
    %c0_1 = arith.constant 0 : index
    %c0_2 = arith.constant 0 : index
    %1 = vector.load %arg2[%c0_1, %c0_2] : memref<128x16xf32, #tpu.memory_space<vmem>>, vector<128x16xf32>
    %cst = arith.constant dense<0.000000e+00> : vector<128x128xf32>
    %2 = tpu.matmul %1, %0, %cst {dimension_numbers = #tpu.dot_dimension_numbers<[1], [1], [0], [0], [0, 0, 1, 0], [], []>} : vector<128x16xf32>, vector<128x16xf32>, vector<128x128xf32> -> vector<128x128xf32>
    %c0_3 = arith.constant 0 : index
    %c0_4 = arith.constant 0 : index
    %3 = vector.load %arg3[%c0_3, %c0_4] : memref<128x1xf32, #tpu.memory_space<vmem>>, vector<128x1xf32>
    %4 = vector.broadcast %3 : vector<128x1xf32> to vector<128x128xf32>
    %5 = arith.addf %2, %4 : vector<128x128xf32>
    %cst_5 = arith.constant 0.000000e+00 : f32
    %6 = vector.broadcast %cst_5 : f32 to vector<128x128xf32>
    %7 = arith.maximumf %5, %6 : vector<128x128xf32>
    %c0_6 = arith.constant 0 : index
    %c0_7 = arith.constant 0 : index
    %8 = vector.load %arg4[%c0_6, %c0_7] : memref<128x128xf32, #tpu.memory_space<vmem>>, vector<128x128xf32>
    %cst_8 = arith.constant dense<0.000000e+00> : vector<128x128xf32>
    %9 = tpu.matmul %8, %7, %cst_8 {dimension_numbers = #tpu.dot_dimension_numbers<[1], [0], [0], [1], [0, 0, 1, 1], [], []>} : vector<128x128xf32>, vector<128x128xf32>, vector<128x128xf32> -> vector<128x128xf32>
    %c0_9 = arith.constant 0 : index
    %c0_10 = arith.constant 0 : index
    %10 = vector.load %arg5[%c0_9, %c0_10] : memref<128x1xf32, #tpu.memory_space<vmem>>, vector<128x1xf32>
    %11 = vector.broadcast %10 : vector<128x1xf32> to vector<128x128xf32>
    %12 = arith.addf %9, %11 : vector<128x128xf32>
    %cst_11 = arith.constant 0.000000e+00 : f32
    %13 = vector.broadcast %cst_11 : f32 to vector<128x128xf32>
    %14 = arith.maximumf %12, %13 : vector<128x128xf32>
    %c0_12 = arith.constant 0 : index
    %c0_13 = arith.constant 0 : index
    %15 = vector.load %arg6[%c0_12, %c0_13] : memref<128x1xf32, #tpu.memory_space<vmem>>, vector<128x1xf32>
    %16 = vector.broadcast %15 : vector<128x1xf32> to vector<128x128xf32>
    %17 = arith.mulf %14, %16 : vector<128x128xf32>
    %cst_14 = arith.constant dense<0.000000e+00> : vector<128xf32>
    %18 = vector.multi_reduction <add>, %17, %cst_14 [0] : vector<128x128xf32> to vector<128xf32>
    %19 = vector.shape_cast %18 : vector<128xf32> to vector<1x128xf32>
    %c0_15 = arith.constant 0 : index
    %c0_16 = arith.constant 0 : index
    %20 = memref.load %arg7[%c0_15, %c0_16] : memref<1x1xf32, #tpu.memory_space<smem>>
    %21 = vector.broadcast %20 : f32 to vector<1x128xf32>
    %22 = arith.addf %19, %21 : vector<1x128xf32>
    %23 = vector.shape_cast %22 : vector<1x128xf32> to vector<1x1x128xf32>
    %c0_17 = arith.constant 0 : index
    %c0_18 = arith.constant 0 : index
    %c0_19 = arith.constant 0 : index
    %24 = vector.load %arg8[%c0_17, %c0_18, %c0_19] : memref<1x1x128xf32, #tpu.memory_space<vmem>>, vector<1x1x128xf32>
    tpu.vector_store %arg8[%c0_17, %c0_18, %c0_19], %23 {strides = array<i32>} : memref<1x1x128xf32, #tpu.memory_space<vmem>>, vector<1x1x128xf32>,
    return
  }
  func.func @transform_0(%arg0: i32) -> (i32, i32) {
    %c0_i32 = arith.constant 0 : i32
    %c0_i32_0 = arith.constant 0 : i32
    return %arg0, %c0_i32 : i32, i32
  }
  func.func @transform_1(%arg0: i32) -> (i32, i32) {
    %c0_i32 = arith.constant 0 : i32
    %c0_i32_0 = arith.constant 0 : i32
    %c0_i32_1 = arith.constant 0 : i32
    return %c0_i32, %c0_i32_0 : i32, i32
  }
  func.func @transform_2(%arg0: i32) -> (i32, i32) {
    %c0_i32 = arith.constant 0 : i32
    %c0_i32_0 = arith.constant 0 : i32
    %c0_i32_1 = arith.constant 0 : i32
    return %c0_i32, %c0_i32_0 : i32, i32
  }
  func.func @transform_3(%arg0: i32) -> (i32, i32) {
    %c0_i32 = arith.constant 0 : i32
    %c0_i32_0 = arith.constant 0 : i32
    %c0_i32_1 = arith.constant 0 : i32
    return %c0_i32, %c0_i32_0 : i32, i32
  }
  func.func @transform_4(%arg0: i32) -> (i32, i32) {
    %c0_i32 = arith.constant 0 : i32
    %c0_i32_0 = arith.constant 0 : i32
    %c0_i32_1 = arith.constant 0 : i32
    return %c0_i32, %c0_i32_0 : i32, i32
  }
  func.func @transform_5(%arg0: i32) -> (i32, i32) {
    %c0_i32 = arith.constant 0 : i32
    %c0_i32_0 = arith.constant 0 : i32
    %c0_i32_1 = arith.constant 0 : i32
    return %c0_i32, %c0_i32_0 : i32, i32
  }
  func.func @transform_6(%arg0: i32) -> (i32, i32) {
    %c0_i32 = arith.constant 0 : i32
    %c0_i32_0 = arith.constant 0 : i32
    %c0_i32_1 = arith.constant 0 : i32
    return %c0_i32, %c0_i32_0 : i32, i32
  }
  func.func @transform_7(%arg0: i32) -> (i32, i32, i32) {
    %c0_i32 = arith.constant 0 : i32
    %c0_i32_0 = arith.constant 0 : i32
    %c0_i32_1 = arith.constant 0 : i32
    return %arg0, %c0_i32, %c0_i32_0 : i32, i32, i32
  }
}

</mosaic_0001>

<llo_original>
// kernel: tpu_custom_call.1
$region0: #{tpu_custom_call.1}
  #allocation0 [shape = 'u32[]', space=smem, size = 0x4, offset = 0x4, fixed_abs, tag = 'smem constant byte address 0x4 - core index']
  #allocation1 [shape = 'u32[72,128]{1,0:T(1,128)}', space=vmem, size = 0x9000, scoped, tag = 'internal scratch']
  #allocation2 [shape = 'f32[1,1]{1,0:T(1,128)S(6)}', space=smem, size = 0x200, scoped, tag = 'scoped memory for tpu_custom_call.1']
  %s0 = inlined_call_operand.vmem [shape: f32[8,16], index: 0, kind: input, shape index: {}]
  %s1 = inlined_call_operand.vmem [shape: f32[128,16], index: 1, kind: input, shape index: {}]
  %s2 = inlined_call_operand.vmem [shape: f32[128,1], index: 2, kind: input, shape index: {}]
  %s3 = inlined_call_operand.vmem [shape: f32[128,128], index: 3, kind: input, shape index: {}]
  %s4 = inlined_call_operand.vmem [shape: f32[128,1], index: 4, kind: input, shape index: {}]
  %s5 = inlined_call_operand.vmem [shape: f32[128,1], index: 5, kind: input, shape index: {}]
  %s6 = inlined_call_operand.<no memory space> [shape: f32[1,1], index: 6, kind: input, shape index: {}]
  %s7 = inlined_call_operand.hbm [shape: f32[1,1,128], index: 7, kind: output, shape index: {}]
  %s8 = sld [smem:[#allocation0]]
  $region38: #{tpu_custom_call.1} parent=0
    _
  %s10 = ssub.s32 1, %s8
  %s11 = scalar_select 0, %s10, %s8
  %12 = sst [smem:[#allocation2]] %s6
  $region1: #{tpu_custom_call.1} parent=0
    #allocation3 [shape = 'u8[512]{0}', space=vmem, size = 0x400, scoped, tag = 'output window, operand 0, single buffered']
    #allocation4 [shape = 's32[1]{0}', space=sflag, size = 0x4, scoped, tag = 'scoped memory for tpu_custom_call.1']
    %13 = vsyncpa [#allocation4], 0
    // Predicated region
    $region2: #{tpu_custom_call.1} parent=1 // pred_check
      _
    $region3: #{tpu_custom_call.1} parent=1 // pred_check_branch
      %15 = sbr.rel (0) target = $region5
    $region4: #{tpu_custom_call.1} parent=1 // pred_region
      _
    $region5: #{tpu_custom_call.1} parent=1 // pred_fallthru
      _
    // Predicated region
    $region6: #{tpu_custom_call.1} parent=1 // pred_check
      _
    $region7: #{tpu_custom_call.1} parent=1 // pred_check_branch
      %17 = sbr.rel (0) target = $region9
    $region8: #{tpu_custom_call.1} parent=1 // pred_region
      _
    $region9: #{tpu_custom_call.1} parent=1 // pred_fallthru
      _
    // Predicated region
    $region10: #{tpu_custom_call.1} parent=1 // pred_check
      _
    $region11: #{tpu_custom_call.1} parent=1 // pred_check_branch
      %19 = sbr.rel (0) target = $region13
    $region12: #{tpu_custom_call.1} parent=1 // pred_region
      _
    $region13: #{tpu_custom_call.1} parent=1 // pred_fallthru
      _
    // Predicated region
    $region14: #{tpu_custom_call.1} parent=1 // pred_check
      _
    $region15: #{tpu_custom_call.1} parent=1 // pred_check_branch
      %21 = sbr.rel (0) target = $region17
    $region16: #{tpu_custom_call.1} parent=1 // pred_region
      _
    $region17: #{tpu_custom_call.1} parent=1 // pred_fallthru
      _
    // Predicated region
    $region18: #{tpu_custom_call.1} parent=1 // pred_check
      _
    $region19: #{tpu_custom_call.1} parent=1 // pred_check_branch
      %23 = sbr.rel (0) target = $region21
    $region20: #{tpu_custom_call.1} parent=1 // pred_region
      _
    $region21: #{tpu_custom_call.1} parent=1 // pred_fallthru
      _
    // Predicated region
    $region22: #{tpu_custom_call.1} parent=1 // pred_check
      _
    $region23: #{tpu_custom_call.1} parent=1 // pred_check_branch
      %25 = sbr.rel (0) target = $region25
    $region24: #{tpu_custom_call.1} parent=1 // pred_region
      _
    $region25: #{tpu_custom_call.1} parent=1 // pred_fallthru
      _
    // Predicated region
    $region26: #{tpu_custom_call.1} parent=1 // pred_check
      _
    $region27: #{tpu_custom_call.1} parent=1 // pred_check_branch
      %27 = sbr.rel (0) target = $region29
    $region28: #{tpu_custom_call.1} parent=1 // pred_region
      _
    $region29: #{tpu_custom_call.1} parent=1 // pred_fallthru
      _
    %v28 = vld [vmem:[%s0] sm:$0xff]
    %v29 = vld [vmem:[%s0 + $0x8] sm:$0xff]
    %v30 = vld [vmem:[%s0 + $0x10] sm:$0xff]
    %v31 = vld [vmem:[%s0 + $0x18] sm:$0xff]
    %v32 = vld [vmem:[%s0 + $0x20] sm:$0xff]
    %v33 = vld [vmem:[%s0 + $0x28] sm:$0xff]
    %v34 = vld [vmem:[%s0 + $0x30] sm:$0xff]
    %v35 = vld [vmem:[%s0 + $0x38] sm:$0xff]
    %v36 = vld [vmem:[%s0 + $0x40] sm:$0xff]
    %v37 = vld [vmem:[%s0 + $0x48] sm:$0xff]
    %v38 = vld [vmem:[%s0 + $0x50] sm:$0xff]
    %v39 = vld [vmem:[%s0 + $0x58] sm:$0xff]
    %v40 = vld [vmem:[%s0 + $0x60] sm:$0xff]
    %v41 = vld [vmem:[%s0 + $0x68] sm:$0xff]
    %v42 = vld [vmem:[%s0 + $0x70] sm:$0xff]
    %v43 = vld [vmem:[%s0 + $0x78] sm:$0xff]
    %v44 = vld [vmem:[%s1] sm:$0xff]
    %v45 = vld [vmem:[%s1 + $0x8] sm:$0xff]
    %v46 = vld [vmem:[%s1 + $0x10] sm:$0xff]
    %v47 = vld [vmem:[%s1 + $0x18] sm:$0xff]
    %v48 = vld [vmem:[%s1 + $0x20] sm:$0xff]
    %v49 = vld [vmem:[%s1 + $0x28] sm:$0xff]
    %v50 = vld [vmem:[%s1 + $0x30] sm:$0xff]
    %v51 = vld [vmem:[%s1 + $0x38] sm:$0xff]
    %v52 = vld [vmem:[%s1 + $0x40] sm:$0xff]
    %v53 = vld [vmem:[%s1 + $0x48] sm:$0xff]
    %v54 = vld [vmem:[%s1 + $0x50] sm:$0xff]
    %v55 = vld [vmem:[%s1 + $0x58] sm:$0xff]
    %v56 = vld [vmem:[%s1 + $0x60] sm:$0xff]
    %v57 = vld [vmem:[%s1 + $0x68] sm:$0xff]
    %v58 = vld [vmem:[%s1 + $0x70] sm:$0xff]
    %v59 = vld [vmem:[%s1 + $0x78] sm:$0xff]
    %v60 = vld [vmem:[%s2] sm:$0xff]
    %v61 = vld [vmem:[%s2 + $0x8] sm:$0xff]
    %v62 = vld [vmem:[%s2 + $0x10] sm:$0xff]
    %v63 = vld [vmem:[%s2 + $0x18] sm:$0xff]
    %v64 = vld [vmem:[%s2 + $0x20] sm:$0xff]
    %v65 = vld [vmem:[%s2 + $0x28] sm:$0xff]
    %v66 = vld [vmem:[%s2 + $0x30] sm:$0xff]
    %v67 = vld [vmem:[%s2 + $0x38] sm:$0xff]
    %v68 = vld [vmem:[%s2 + $0x40] sm:$0xff]
    %v69 = vld [vmem:[%s2 + $0x48] sm:$0xff]
    %v70 = vld [vmem:[%s2 + $0x50] sm:$0xff]
    %v71 = vld [vmem:[%s2 + $0x58] sm:$0xff]
    %v72 = vld [vmem:[%s2 + $0x60] sm:$0xff]
    %v73 = vld [vmem:[%s2 + $0x68] sm:$0xff]
    %v74 = vld [vmem:[%s2 + $0x70] sm:$0xff]
    %v75 = vld [vmem:[%s2 + $0x78] sm:$0xff]
    %77 = vset.pattern.permute.xlu0 0
    %78 = vperm.xlu0 %77, %v60
    %v79 = vpop.permute.xlu0 %78
    %82 = vset.pattern.permute.xlu0 0
    %83 = vperm.xlu0 %82, %v61
    %v84 = vpop.permute.xlu0 %83
    %87 = vset.pattern.permute.xlu0 0
    %88 = vperm.xlu0 %87, %v62
    %v89 = vpop.permute.xlu0 %88
    %92 = vset.pattern.permute.xlu0 0
    %93 = vperm.xlu0 %92, %v63
    %v94 = vpop.permute.xlu0 %93
    %97 = vset.pattern.permute.xlu0 0
    %98 = vperm.xlu0 %97, %v64
    %v99 = vpop.permute.xlu0 %98
    %102 = vset.pattern.permute.xlu0 0
    %103 = vperm.xlu0 %102, %v65
    %v104 = vpop.permute.xlu0 %103
    %107 = vset.pattern.permute.xlu0 0
    %108 = vperm.xlu0 %107, %v66
    %v109 = vpop.permute.xlu0 %108
    %112 = vset.pattern.permute.xlu0 0
    %113 = vperm.xlu0 %112, %v67
    %v114 = vpop.permute.xlu0 %113
    %117 = vset.pattern.permute.xlu0 0
    %118 = vperm.xlu0 %117, %v68
    %v119 = vpop.permute.xlu0 %118
    %122 = vset.pattern.permute.xlu0 0
    %123 = vperm.xlu0 %122, %v69
    %v124 = vpop.permute.xlu0 %123
    %127 = vset.pattern.permute.xlu0 0
    %128 = vperm.xlu0 %127, %v70
    %v129 = vpop.permute.xlu0 %128
    %132 = vset.pattern.permute.xlu0 0
    %133 = vperm.xlu0 %132, %v71
    %v134 = vpop.permute.xlu0 %133
    %137 = vset.pattern.permute.xlu0 0
    %138 = vperm.xlu0 %137, %v72
    %v139 = vpop.permute.xlu0 %138
    %142 = vset.pattern.permute.xlu0 0
    %143 = vperm.xlu0 %142, %v73
    %v144 = vpop.permute.xlu0 %143
    %147 = vset.pattern.permute.xlu0 0
    %148 = vperm.xlu0 %147, %v74
    %v149 = vpop.permute.xlu0 %148
    %152 = vset.pattern.permute.xlu0 0
    %153 = vperm.xlu0 %152, %v75
    %v154 = vpop.permute.xlu0 %153
    %vm156 = vcmask 130048
    %v158 = vsel %vm156, %v44, 0
    %v161 = vsel %vm156, %v45, 0
    %v164 = vsel %vm156, %v46, 0
    %v167 = vsel %vm156, %v47, 0
    %v170 = vsel %vm156, %v48, 0
    %v173 = vsel %vm156, %v49, 0
    %v176 = vsel %vm156, %v50, 0
    %v179 = vsel %vm156, %v51, 0
    %v182 = vsel %vm156, %v52, 0
    %v185 = vsel %vm156, %v53, 0
    %v188 = vsel %vm156, %v54, 0
    %v191 = vsel %vm156, %v55, 0
    %v194 = vsel %vm156, %v56, 0
    %v197 = vsel %vm156, %v57, 0
    %v200 = vsel %vm156, %v58, 0
    %v203 = vsel %vm156, %v59, 0
    %v206 = vsel %vm156, %v28, 0
    %v209 = vsel %vm156, %v29, 0
    %v212 = vsel %vm156, %v30, 0
    %v215 = vsel %vm156, %v31, 0
    %v218 = vsel %vm156, %v32, 0
    %v221 = vsel %vm156, %v33, 0
    %v224 = vsel %vm156, %v34, 0
    %v227 = vsel %vm156, %v35, 0
    %v230 = vsel %vm156, %v36, 0
    %v233 = vsel %vm156, %v37, 0
    %v236 = vsel %vm156, %v38, 0
    %v239 = vsel %vm156, %v39, 0
    %v242 = vsel %vm156, %v40, 0
    %v245 = vsel %vm156, %v41, 0
    %v248 = vsel %vm156, %v42, 0
    %v251 = vsel %vm156, %v43, 0
    %253 = vmatpush.xpose.msra.mxu0 %v251
    %254 = vmatpush.xpose.msra.mxu0 %v248
    %255 = vmatpush.xpose.msra.mxu0 %v245
    %256 = vmatpush.xpose.msra.mxu0 %v242
    %257 = vmatpush.xpose.msra.mxu0 %v239
    %258 = vmatpush.xpose.msra.mxu0 %v236
    %259 = vmatpush.xpose.msra.mxu0 %v233
    %260 = vmatpush.xpose.msra.mxu0 %v230
    %261 = vmatpush.xpose.msra.mxu0 %v227
    %262 = vmatpush.xpose.msra.mxu0 %v224
    %263 = vmatpush.xpose.msra.mxu0 %v221
    %264 = vmatpush.xpose.msra.mxu0 %v218
    %265 = vmatpush.xpose.msra.mxu0 %v215
    %266 = vmatpush.xpose.msra.mxu0 %v212
    %267 = vmatpush.xpose.msra.mxu0 %v209
    %268 = vmatpush.xpose.msra.mxu0 %v206
    %269 = vmatmul.f32.gmra.mxu0 %v158
    %v270 = vpop.f32.mrf.mxu0
    %v271 = vadd.f32 %v79, %v270
    %272 = vmatmul.f32.gmra.mxu0 %v161
    %v273 = vpop.f32.mrf.mxu0
    %v274 = vadd.f32 %v84, %v273
    %275 = vmatmul.f32.gmra.mxu0 %v164
    %v276 = vpop.f32.mrf.mxu0
    %v277 = vadd.f32 %v89, %v276
    %278 = vmatmul.f32.gmra.mxu0 %v167
    %v279 = vpop.f32.mrf.mxu0
    %v280 = vadd.f32 %v94, %v279
    %281 = vmatmul.f32.gmra.mxu0 %v170
    %v282 = vpop.f32.mrf.mxu0
    %v283 = vadd.f32 %v99, %v282
    %284 = vmatmul.f32.gmra.mxu0 %v173
    %v285 = vpop.f32.mrf.mxu0
    %v286 = vadd.f32 %v104, %v285
    %287 = vmatmul.f32.gmra.mxu0 %v176
    %v288 = vpop.f32.mrf.mxu0
    %v289 = vadd.f32 %v109, %v288
    %290 = vmatmul.f32.gmra.mxu0 %v179
    %v291 = vpop.f32.mrf.mxu0
    %v292 = vadd.f32 %v114, %v291
    %293 = vmatmul.f32.gmra.mxu0 %v182
    %v294 = vpop.f32.mrf.mxu0
    %v295 = vadd.f32 %v119, %v294
    %296 = vmatmul.f32.gmra.mxu0 %v185
    %v297 = vpop.f32.mrf.mxu0
    %v298 = vadd.f32 %v124, %v297
    %299 = vmatmul.f32.gmra.mxu0 %v188
    %v300 = vpop.f32.mrf.mxu0
    %v301 = vadd.f32 %v129, %v300
    %302 = vmatmul.f32.gmra.mxu0 %v191
    %v303 = vpop.f32.mrf.mxu0
    %v304 = vadd.f32 %v134, %v303
    %305 = vmatmul.f32.gmra.mxu0 %v194
    %v306 = vpop.f32.mrf.mxu0
    %v307 = vadd.f32 %v139, %v306
    %308 = vmatmul.f32.gmra.mxu0 %v197
    %v309 = vpop.f32.mrf.mxu0
    %v310 = vadd.f32 %v144, %v309
    %311 = vmatmul.f32.gmra.mxu0 %v200
    %v312 = vpop.f32.mrf.mxu0
    %v313 = vadd.f32 %v149, %v312
    %314 = vmatmul.f32.gmra.mxu0 %v203
    %v315 = vpop.f32.mrf.mxu0
    %v316 = vadd.f32 %v154, %v315
    %317 = vdwg.mxu0
    %v318 = vmax.f32 %v271, 0.0
    %v319 = vmax.f32 %v274, 0.0
    %v320 = vmax.f32 %v277, 0.0
    %v321 = vmax.f32 %v280, 0.0
    %v322 = vmax.f32 %v283, 0.0
    %v323 = vmax.f32 %v286, 0.0
    %v324 = vmax.f32 %v289, 0.0
    %v325 = vmax.f32 %v292, 0.0
    %v326 = vmax.f32 %v295, 0.0
    %v327 = vmax.f32 %v298, 0.0
    %v328 = vmax.f32 %v301, 0.0
    %v329 = vmax.f32 %v304, 0.0
    %v330 = vmax.f32 %v307, 0.0
    %v331 = vmax.f32 %v310, 0.0
    %v332 = vmax.f32 %v313, 0.0
    %v333 = vmax.f32 %v316, 0.0
    %v334 = vld [vmem:[%s3] sm:$0xff]
    %v335 = vld [vmem:[%s3 + $0x8] sm:$0xff]
    %v336 = vld [vmem:[%s3 + $0x10] sm:$0xff]
    %v337 = vld [vmem:[%s3 + $0x18] sm:$0xff]
    %v338 = vld [vmem:[%s3 + $0x20] sm:$0xff]
    %v339 = vld [vmem:[%s3 + $0x28] sm:$0xff]
    %v340 = vld [vmem:[%s3 + $0x30] sm:$0xff]
    %v341 = vld [vmem:[%s3 + $0x38] sm:$0xff]
    %v342 = vld [vmem:[%s3 + $0x40] sm:$0xff]
    %v343 = vld [vmem:[%s3 + $0x48] sm:$0xff]
    %v344 = vld [vmem:[%s3 + $0x50] sm:$0xff]
    %v345 = vld [vmem:[%s3 + $0x58] sm:$0xff]
    %v346 = vld [vmem:[%s3 + $0x60] sm:$0xff]
    %v347 = vld [vmem:[%s3 + $0x68] sm:$0xff]
    %v348 = vld [vmem:[%s3 + $0x70] sm:$0xff]
    %v349 = vld [vmem:[%s3 + $0x78] sm:$0xff]
    %v350 = vld [vmem:[%s4] sm:$0xff]
    %v351 = vld [vmem:[%s4 + $0x8] sm:$0xff]
    %v352 = vld [vmem:[%s4 + $0x10] sm:$0xff]
    %v353 = vld [vmem:[%s4 + $0x18] sm:$0xff]
    %v354 = vld [vmem:[%s4 + $0x20] sm:$0xff]
    %v355 = vld [vmem:[%s4 + $0x28] sm:$0xff]
    %v356 = vld [vmem:[%s4 + $0x30] sm:$0xff]
    %v357 = vld [vmem:[%s4 + $0x38] sm:$0xff]
    %v358 = vld [vmem:[%s4 + $0x40] sm:$0xff]
    %v359 = vld [vmem:[%s4 + $0x48] sm:$0xff]
    %v360 = vld [vmem:[%s4 + $0x50] sm:$0xff]
    %v361 = vld [vmem:[%s4 + $0x58] sm:$0xff]
    %v362 = vld [vmem:[%s4 + $0x60] sm:$0xff]
    %v363 = vld [vmem:[%s4 + $0x68] sm:$0xff]
    %v364 = vld [vmem:[%s4 + $0x70] sm:$0xff]
    %v365 = vld [vmem:[%s4 + $0x78] sm:$0xff]
    %367 = vset.pattern.permute.xlu0 0
    %368 = vperm.xlu0 %367, %v350
    %v369 = vpop.permute.xlu0 %368
    %372 = vset.pattern.permute.xlu0 0
    %373 = vperm.xlu0 %372, %v351
    %v374 = vpop.permute.xlu0 %373
    %377 = vset.pattern.permute.xlu0 0
    %378 = vperm.xlu0 %377, %v352
    %v379 = vpop.permute.xlu0 %378
    %382 = vset.pattern.permute.xlu0 0
    %383 = vperm.xlu0 %382, %v353
    %v384 = vpop.permute.xlu0 %383
    %387 = vset.pattern.permute.xlu0 0
    %388 = vperm.xlu0 %387, %v354
    %v389 = vpop.permute.xlu0 %388
    %392 = vset.pattern.permute.xlu0 0
    %393 = vperm.xlu0 %392, %v355
    %v394 = vpop.permute.xlu0 %393
    %397 = vset.pattern.permute.xlu0 0
    %398 = vperm.xlu0 %397, %v356
    %v399 = vpop.permute.xlu0 %398
    %402 = vset.pattern.permute.xlu0 0
    %403 = vperm.xlu0 %402, %v357
    %v404 = vpop.permute.xlu0 %403
    %407 = vset.pattern.permute.xlu0 0
    %408 = vperm.xlu0 %407, %v358
    %v409 = vpop.permute.xlu0 %408
    %412 = vset.pattern.permute.xlu0 0
    %413 = vperm.xlu0 %412, %v359
    %v414 = vpop.permute.xlu0 %413
    %417 = vset.pattern.permute.xlu0 0
    %418 = vperm.xlu0 %417, %v360
    %v419 = vpop.permute.xlu0 %418
    %422 = vset.pattern.permute.xlu0 0
    %423 = vperm.xlu0 %422, %v361
    %v424 = vpop.permute.xlu0 %423
    %427 = vset.pattern.permute.xlu0 0
    %428 = vperm.xlu0 %427, %v362
    %v429 = vpop.permute.xlu0 %428
    %432 = vset.pattern.permute.xlu0 0
    %433 = vperm.xlu0 %432, %v363
    %v434 = vpop.permute.xlu0 %433
    %437 = vset.pattern.permute.xlu0 0
    %438 = vperm.xlu0 %437, %v364
    %v439 = vpop.permute.xlu0 %438
    %442 = vset.pattern.permute.xlu0 0
    %443 = vperm.xlu0 %442, %v365
    %v444 = vpop.permute.xlu0 %443
    %446 = vmatpush.msra.mxu0 %v333
    %447 = vmatpush.msra.mxu0 %v332
    %448 = vmatpush.msra.mxu0 %v331
    %449 = vmatpush.msra.mxu0 %v330
    %450 = vmatpush.msra.mxu0 %v329
    %451 = vmatpush.msra.mxu0 %v328
    %452 = vmatpush.msra.mxu0 %v327
    %453 = vmatpush.msra.mxu0 %v326
    %454 = vmatpush.msra.mxu0 %v325
    %455 = vmatpush.msra.mxu0 %v324
    %456 = vmatpush.msra.mxu0 %v323
    %457 = vmatpush.msra.mxu0 %v322
    %458 = vmatpush.msra.mxu0 %v321
    %459 = vmatpush.msra.mxu0 %v320
    %460 = vmatpush.msra.mxu0 %v319
    %461 = vmatpush.msra.mxu0 %v318
    %462 = vmatmul.f32.gmra.mxu0 %v334
    %v463 = vpop.f32.mrf.mxu0
    %v464 = vadd.f32 %v369, %v463
    %465 = vmatmul.f32.gmra.mxu0 %v335
    %v466 = vpop.f32.mrf.mxu0
    %v467 = vadd.f32 %v374, %v466
    %468 = vmatmul.f32.gmra.mxu0 %v336
    %v469 = vpop.f32.mrf.mxu0
    %v470 = vadd.f32 %v379, %v469
    %471 = vmatmul.f32.gmra.mxu0 %v337
    %v472 = vpop.f32.mrf.mxu0
    %v473 = vadd.f32 %v384, %v472
    %474 = vmatmul.f32.gmra.mxu0 %v338
    %v475 = vpop.f32.mrf.mxu0
    %v476 = vadd.f32 %v389, %v475
    %477 = vmatmul.f32.gmra.mxu0 %v339
    %v478 = vpop.f32.mrf.mxu0
    %v479 = vadd.f32 %v394, %v478
    %480 = vmatmul.f32.gmra.mxu0 %v340
    %v481 = vpop.f32.mrf.mxu0
    %v482 = vadd.f32 %v399, %v481
    %483 = vmatmul.f32.gmra.mxu0 %v341
    %v484 = vpop.f32.mrf.mxu0
    %v485 = vadd.f32 %v404, %v484
    %486 = vmatmul.f32.gmra.mxu0 %v342
    %v487 = vpop.f32.mrf.mxu0
    %v488 = vadd.f32 %v409, %v487
    %489 = vmatmul.f32.gmra.mxu0 %v343
    %v490 = vpop.f32.mrf.mxu0
    %v491 = vadd.f32 %v414, %v490
    %492 = vmatmul.f32.gmra.mxu0 %v344
    %v493 = vpop.f32.mrf.mxu0
    %v494 = vadd.f32 %v419, %v493
    %495 = vmatmul.f32.gmra.mxu0 %v345
    %v496 = vpop.f32.mrf.mxu0
    %v497 = vadd.f32 %v424, %v496
    %498 = vmatmul.f32.gmra.mxu0 %v346
    %v499 = vpop.f32.mrf.mxu0
    %v500 = vadd.f32 %v429, %v499
    %501 = vmatmul.f32.gmra.mxu0 %v347
    %v502 = vpop.f32.mrf.mxu0
    %v503 = vadd.f32 %v434, %v502
    %504 = vmatmul.f32.gmra.mxu0 %v348
    %v505 = vpop.f32.mrf.mxu0
    %v506 = vadd.f32 %v439, %v505
    %507 = vmatmul.f32.gmra.mxu0 %v349
    %v508 = vpop.f32.mrf.mxu0
    %v509 = vadd.f32 %v444, %v508
    %510 = vdwg.mxu0
    %v511 = vmax.f32 %v464, 0.0
    %v512 = vmax.f32 %v467, 0.0
    %v513 = vmax.f32 %v470, 0.0
    %v514 = vmax.f32 %v473, 0.0
    %v515 = vmax.f32 %v476, 0.0
    %v516 = vmax.f32 %v479, 0.0
    %v517 = vmax.f32 %v482, 0.0
    %v518 = vmax.f32 %v485, 0.0
    %v519 = vmax.f32 %v488, 0.0
    %v520 = vmax.f32 %v491, 0.0
    %v521 = vmax.f32 %v494, 0.0
    %v522 = vmax.f32 %v497, 0.0
    %v523 = vmax.f32 %v500, 0.0
    %v524 = vmax.f32 %v503, 0.0
    %v525 = vmax.f32 %v506, 0.0
    %v526 = vmax.f32 %v509, 0.0
    %v527 = vld [vmem:[%s5] sm:$0xff]
    %v528 = vld [vmem:[%s5 + $0x8] sm:$0xff]
    %v529 = vld [vmem:[%s5 + $0x10] sm:$0xff]
    %v530 = vld [vmem:[%s5 + $0x18] sm:$0xff]
    %v531 = vld [vmem:[%s5 + $0x20] sm:$0xff]
    %v532 = vld [vmem:[%s5 + $0x28] sm:$0xff]
    %v533 = vld [vmem:[%s5 + $0x30] sm:$0xff]
    %v534 = vld [vmem:[%s5 + $0x38] sm:$0xff]
    %v535 = vld [vmem:[%s5 + $0x40] sm:$0xff]
    %v536 = vld [vmem:[%s5 + $0x48] sm:$0xff]
    %v537 = vld [vmem:[%s5 + $0x50] sm:$0xff]
    %v538 = vld [vmem:[%s5 + $0x58] sm:$0xff]
    %v539 = vld [vmem:[%s5 + $0x60] sm:$0xff]
    %v540 = vld [vmem:[%s5 + $0x68] sm:$0xff]
    %v541 = vld [vmem:[%s5 + $0x70] sm:$0xff]
    %v542 = vld [vmem:[%s5 + $0x78] sm:$0xff]
    %544 = vset.pattern.permute.xlu0 0
    %545 = vperm.xlu0 %544, %v527
    %v546 = vpop.permute.xlu0 %545
    %549 = vset.pattern.permute.xlu0 0
    %550 = vperm.xlu0 %549, %v528
    %v551 = vpop.permute.xlu0 %550
    %554 = vset.pattern.permute.xlu0 0
    %555 = vperm.xlu0 %554, %v529
    %v556 = vpop.permute.xlu0 %555
    %559 = vset.pattern.permute.xlu0 0
    %560 = vperm.xlu0 %559, %v530
    %v561 = vpop.permute.xlu0 %560
    %564 = vset.pattern.permute.xlu0 0
    %565 = vperm.xlu0 %564, %v531
    %v566 = vpop.permute.xlu0 %565
    %569 = vset.pattern.permute.xlu0 0
    %570 = vperm.xlu0 %569, %v532
    %v571 = vpop.permute.xlu0 %570
    %574 = vset.pattern.permute.xlu0 0
    %575 = vperm.xlu0 %574, %v533
    %v576 = vpop.permute.xlu0 %575
    %579 = vset.pattern.permute.xlu0 0
    %580 = vperm.xlu0 %579, %v534
    %v581 = vpop.permute.xlu0 %580
    %584 = vset.pattern.permute.xlu0 0
    %585 = vperm.xlu0 %584, %v535
    %v586 = vpop.permute.xlu0 %585
    %589 = vset.pattern.permute.xlu0 0
    %590 = vperm.xlu0 %589, %v536
    %v591 = vpop.permute.xlu0 %590
    %594 = vset.pattern.permute.xlu0 0
    %595 = vperm.xlu0 %594, %v537
    %v596 = vpop.permute.xlu0 %595
    %599 = vset.pattern.permute.xlu0 0
    %600 = vperm.xlu0 %599, %v538
    %v601 = vpop.permute.xlu0 %600
    %604 = vset.pattern.permute.xlu0 0
    %605 = vperm.xlu0 %604, %v539
    %v606 = vpop.permute.xlu0 %605
    %609 = vset.pattern.permute.xlu0 0
    %610 = vperm.xlu0 %609, %v540
    %v611 = vpop.permute.xlu0 %610
    %614 = vset.pattern.permute.xlu0 0
    %615 = vperm.xlu0 %614, %v541
    %v616 = vpop.permute.xlu0 %615
    %619 = vset.pattern.permute.xlu0 0
    %620 = vperm.xlu0 %619, %v542
    %v621 = vpop.permute.xlu0 %620
    %v623 = vmul.f32 %v511, %v546
    %v624 = vmul.f32 %v512, %v551
    %v625 = vmul.f32 %v513, %v556
    %v626 = vmul.f32 %v514, %v561
    %v627 = vmul.f32 %v515, %v566
    %v628 = vmul.f32 %v516, %v571
    %v629 = vmul.f32 %v517, %v576
    %v630 = vmul.f32 %v518, %v581
    %v631 = vmul.f32 %v519, %v586
    %v632 = vmul.f32 %v520, %v591
    %v633 = vmul.f32 %v521, %v596
    %v634 = vmul.f32 %v522, %v601
    %v635 = vmul.f32 %v523, %v606
    %v636 = vmul.f32 %v524, %v611
    %v637 = vmul.f32 %v525, %v616
    %v638 = vmul.f32 %v526, %v621
    %v639 = vadd.f32 %v623, %v624
    %v640 = vadd.f32 %v639, %v625
    %v641 = vadd.f32 %v640, %v626
    %v642 = vadd.f32 %v641, %v627
    %v643 = vadd.f32 %v642, %v628
    %v644 = vadd.f32 %v643, %v629
    %v645 = vadd.f32 %v644, %v630
    %v646 = vadd.f32 %v645, %v631
    %v647 = vadd.f32 %v646, %v632
    %v648 = vadd.f32 %v647, %v633
    %v649 = vadd.f32 %v648, %v634
    %v650 = vadd.f32 %v649, %v635
    %v651 = vadd.f32 %v650, %v636
    %v652 = vadd.f32 %v651, %v637
    %v653 = vadd.f32 %v652, %v638
    %v654 = vrot.slane %v653, 4
    %v655 = vadd.f32 %v653, %v654
    %v656 = vrot.slane %v655, 2
    %v657 = vadd.f32 %v655, %v656
    %v658 = vrot.slane %v657, 1
    %v659 = vadd.f32 %v657, %v658
    %s660 = sld [smem:[#allocation2]]
    %v661 = vstv %s660
    %v662 = vadd.f32 %v659, %v661
    %663 = vst [vmem:[#allocation3] sm:$0x1] %v662
    // Predicated region
    $region30: #{tpu_custom_call.1} parent=1 // pred_check
      _
    $region31: #{tpu_custom_call.1} parent=1 // pred_check_branch
      %665 = sbr.rel (0) target = $region33
    $region32: #{tpu_custom_call.1} parent=1 // pred_region
      %667 = vsyncadd [#allocation4], 0
      %s669 = sshll.u32 [#allocation3], 4
      %s670 = int_to_ptr.vmem [resolvable:$true] %s669
      %s671 = sshll.u32 %s7, 4
      %s672 = int_to_ptr.hbm [resolvable:$true] %s671
      %674 = dma.vmem_to_hbm [thread:$0]  %s670, 16, %s672, [#allocation4]
    $region33: #{tpu_custom_call.1} parent=1 // pred_fallthru
      _
    // Predicated region
    $region34: #{tpu_custom_call.1} parent=1 // pred_check
      _
    $region35: #{tpu_custom_call.1} parent=1 // pred_check_branch
      %676 = sbr.rel (0) target = $region37
    $region36: #{tpu_custom_call.1} parent=1 // pred_region
      %678 = dma.done [#allocation4], 16
    $region37: #{tpu_custom_call.1} parent=1 // pred_fallthru
      _
    %679 = vsyncpa [#allocation4], 1

</llo_original>
